<compile_context>
chip_gen: v7x
topology: tpu7x:2x2x1
jax: 0.10.0
libtpu: 0.0.40
codegen_flags: <defaults>
</compile_context>

<pallas_src>
import jax
import jax.numpy as jnp
from jax.experimental import pallas as pl
from jax.experimental.pallas import tpu as pltpu

_MIB = 1024 * 1024


def _round_up(v, m):
    return (v + m - 1) // m * m


def _cdiv(a, b):
    return -(-a // b)


def _tpu_vmem_and_cores():
    """Best-effort (per-core VMEM bytes, is-multi-TensorCore-per-chip)."""
    kind = ""
    try:
        kind = jax.devices()[0].device_kind.lower()
    except Exception:
        pass
    vmem_cap = None
    try:
        vmem_cap = int(getattr(pltpu.get_tpu_info(), "vmem_capacity_bytes"))
    except Exception:
        vmem_cap = None
    if vmem_cap is None or vmem_cap <= 0:
        vmem_cap = 64 * _MIB          # conservative fallback, safe on every gen
    multi_tc = "v7" in kind           # v7x: 2 TensorCores per chip
    if multi_tc:
        vmem_cap = min(vmem_cap, 64 * _MIB)   # per-TC VMEM on v7x
    return vmem_cap, multi_tc


# ----------------------------- kernels --------------------------------------

def mlp_kernel_resident(x_ref, w1_ref, b1_ref, w2_ref, b2_ref, o_ref):
    """Weights fully resident in VMEM; one grid step per batch tile."""
    h = jnp.dot(x_ref[...], w1_ref[...], preferred_element_type=jnp.float32)
    h = jnp.maximum(h + b1_ref[...], 0.0)
    # Dropout(p) in eval mode == identity.
    y = jnp.dot(h.astype(w2_ref.dtype), w2_ref[...],
                preferred_element_type=jnp.float32)
    o_ref[...] = (y + b2_ref[...]).astype(o_ref.dtype)


def mlp_kernel_chunked_inplace(x_ref, w1_ref, b1_ref, w2_ref, b2_ref, o_ref):
    """Hidden-dim streaming; f32 output accumulated directly in o_ref."""
    h_idx = pl.program_id(1)

    @pl.when(h_idx == 0)
    def _init():
        o_ref[...] = jnp.zeros_like(o_ref)

    h = jnp.dot(x_ref[...], w1_ref[...], preferred_element_type=jnp.float32)
    h = jnp.maximum(h + b1_ref[...], 0.0)
    # Dropout(p) in eval mode == identity.
    o_ref[...] += jnp.dot(h.astype(w2_ref.dtype), w2_ref[...],
                          preferred_element_type=jnp.float32)

    @pl.when(h_idx == pl.num_programs(1) - 1)
    def _finalize():
        o_ref[...] = o_ref[...] + b2_ref[...]


def mlp_kernel_chunked_scratch(x_ref, w1_ref, b1_ref, w2_ref, b2_ref, o_ref,
                               acc_ref):
    """Hidden-dim streaming; f32 VMEM scratch for non-f32 outputs."""
    h_idx = pl.program_id(1)

    @pl.when(h_idx == 0)
    def _init():
        acc_ref[...] = jnp.zeros_like(acc_ref)

    h = jnp.dot(x_ref[...], w1_ref[...], preferred_element_type=jnp.float32)
    h = jnp.maximum(h + b1_ref[...], 0.0)
    # Dropout(p) in eval mode == identity.
    acc_ref[...] += jnp.dot(h.astype(w2_ref.dtype), w2_ref[...],
                            preferred_element_type=jnp.float32)

    @pl.when(h_idx == pl.num_programs(1) - 1)
    def _finalize():
        o_ref[...] = (acc_ref[...] + b2_ref[...]).astype(o_ref.dtype)


# ----------------------------- wrapper ---------------------------------------

def simple_mlp(x, w1, b1, w2, b2, *, compute_dtype=jnp.bfloat16,
               tile_b=None, tile_h=None, force_chunked=False):
    """y = relu(x @ w1 + b1) @ w2 + b2  (PyTorch SimpleMLP forward, eval mode).

    w1:(d_in, d_hid), w2:(d_hid, d_out); biases may be (n,) or (1, n).
    """
    B, d_in = x.shape
    d_hid = w1.shape[1]
    d_out = w2.shape[1]
    out_dtype = x.dtype

    cdt = jnp.dtype(compute_dtype)
    cdt_sz = cdt.itemsize
    out_sz = jnp.dtype(out_dtype).itemsize

    vmem_cap, multi_tc = _tpu_vmem_and_cores()
    budget = int(vmem_cap * 0.82)          # ~52 MiB on v7x, ~105 MiB on v5e/v6e
    big_vmem = budget >= 80 * _MIB

    # ---- layout alignment --------------------------------------------------
    sub = max(8, 32 // max(cdt_sz, 1))     # f32: 8, bf16: 16, 8-bit: 32 rows
    align_in = 256 if d_in >= 256 else 128
    align_out = 256 if d_out >= 256 else 128
    align_h = 256 if d_hid >= 256 else 128
    d_in_p = _round_up(d_in, align_in)
    d_out_p = _round_up(d_out, align_out)
    d_hid_full = _round_up(d_hid, align_h)

    auto_b = tile_b is None
    auto_h = tile_h is None

    if auto_b:
        tile_b = min(512 if big_vmem else 256, _round_up(B, sub))
        if multi_tc and B >= 2 * sub:
            # >=2 batch grid steps so the "parallel" axis can shard across the
            # two TensorCores (v7x only); single-TC parts keep the big tile.
            tile_b = min(tile_b, _round_up(_cdiv(B, 2), sub))
    else:
        tile_b = max(sub, _round_up(tile_b, sub))

    use_scratch = jnp.dtype(out_dtype) != jnp.dtype(jnp.float32)

    # ---- VMEM need estimates (double-buffered inputs/outputs, conservative) -
    def resident_need(tb):
        return (2 * tb * d_in_p * cdt_sz                 # x tile
                + 2 * d_in_p * d_hid_full * cdt_sz       # W1 (counted x2)
                + 2 * d_hid_full * d_out_p * cdt_sz      # W2 (counted x2)
                + 2 * 8 * (d_hid_full + d_out_p) * 4     # biases (sublane pad)
                + 2 * tb * d_out_p * out_sz              # out tile
                + tb * d_hid_full * (4 + cdt_sz))        # f32 h + cast copy

    def chunked_need(tb, th):
        n = (2 * tb * d_in_p * cdt_sz
             + 2 * d_in_p * th * cdt_sz
             + 2 * th * d_out_p * cdt_sz
             + 2 * 8 * (th + d_out_p) * 4
             + 2 * tb * d_out_p * out_sz
             + tb * th * (4 + cdt_sz))
        if use_scratch:
            n += tb * d_out_p * 4
        return n

    def balance_h(th_target):
        th_target = max(128, min(_round_up(th_target, 128), d_hid_full))
        n = _cdiv(d_hid_full, th_target)
        th = _round_up(_cdiv(d_hid_full, n), 128)
        n = _cdiv(d_hid_full, th)
        return n, th

    # ---- mode selection: keep W1/W2 fully resident when they fit -----------
    resident = False
    if not force_chunked and auto_h:
        if resident_need(tile_b) <= budget:
            resident = True
        elif auto_b:
            # Shrinking the batch tile is usually cheaper than re-streaming
            # the weights from HBM once per batch tile.
            tb = tile_b
            floor = max(sub, min(128, tile_b))
            while tb > floor and resident_need(tb) > budget:
                tb = max(floor, _round_up(tb // 2, sub))
            if resident_need(tb) <= budget:
                tile_b = tb
                resident = True

    if resident:
        nh = 1
        tile_h = d_hid_full
        d_hid_p = d_hid_full
        need = resident_need(tile_b)
    else:
        th_target = (min(1024 if big_vmem else 512, d_hid_full)
                     if auto_h else tile_h)
        nh, tile_h = balance_h(th_target)
        d_hid_p = nh * tile_h
        if auto_h:
            while chunked_need(tile_b, tile_h) > budget and tile_h > 128:
                nh, tile_h = balance_h(tile_h // 2)
                d_hid_p = nh * tile_h
        if auto_b:
            while chunked_need(tile_b, tile_h) > budget and tile_b > sub:
                tile_b = max(sub, _round_up(tile_b // 2, sub))
        need = chunked_need(tile_b, tile_h)

    B_p = _round_up(B, tile_b)
    nb = B_p // tile_b

    # ---- pad & cast operands (cache these in production) --------------------
    b1f = jnp.reshape(b1, (1, d_hid)).astype(jnp.float32)
    b2f = jnp.reshape(b2, (1, d_out)).astype(jnp.float32)
    x_p = jnp.zeros((B_p, d_in_p), cdt).at[:B, :d_in].set(x.astype(cdt))
    w1_p = jnp.zeros((d_in_p, d_hid_p), cdt).at[:d_in, :d_hid].set(w1.astype(cdt))
    b1_p = jnp.zeros((1, d_hid_p), jnp.float32).at[:, :d_hid].set(b1f)
    w2_p = jnp.zeros((d_hid_p, d_out_p), cdt).at[:d_hid, :d_out].set(w2.astype(cdt))
    b2_p = jnp.zeros((1, d_out_p), jnp.float32).at[:, :d_out].set(b2f)

    vmem_limit = int(min(vmem_cap - 2 * _MIB, max(need + 4 * _MIB, 32 * _MIB)))

    w_reads = 1 if resident else nb
    cost = pl.CostEstimate(
        flops=2 * B_p * (d_in_p * d_hid_p + d_hid_p * d_out_p),
        transcendentals=0,
        bytes_accessed=int(
            B_p * d_in_p * cdt_sz
            + w_reads * (d_in_p * d_hid_p + d_hid_p * d_out_p) * cdt_sz
            + (d_hid_p + d_out_p) * 4
            + B_p * d_out_p * out_sz),
    )

    if resident:
        grid = (nb,)
        in_specs = [
            pl.BlockSpec((tile_b, d_in_p), lambda i: (i, 0)),      # x tile
            pl.BlockSpec((d_in_p, d_hid_p), lambda i: (0, 0)),     # W1 resident
            pl.BlockSpec((1, d_hid_p), lambda i: (0, 0)),          # b1 resident
            pl.BlockSpec((d_hid_p, d_out_p), lambda i: (0, 0)),    # W2 resident
            pl.BlockSpec((1, d_out_p), lambda i: (0, 0)),          # b2 resident
        ]
        out_specs = pl.BlockSpec((tile_b, d_out_p), lambda i: (i, 0))
        scratch_shapes = []
        kernel = mlp_kernel_resident
        semantics = ("parallel",)
    else:
        grid = (nb, nh)                                            # hidden last
        in_specs = [
            pl.BlockSpec((tile_b, d_in_p), lambda i, h: (i, 0)),   # x tile
            pl.BlockSpec((d_in_p, tile_h), lambda i, h: (0, h)),   # W1 chunk
            pl.BlockSpec((1, tile_h), lambda i, h: (0, h)),        # b1 chunk
            pl.BlockSpec((tile_h, d_out_p), lambda i, h: (h, 0)),  # W2 chunk
            pl.BlockSpec((1, d_out_p), lambda i, h: (0, 0)),       # b2
        ]
        out_specs = pl.BlockSpec((tile_b, d_out_p), lambda i, h: (i, 0))
        if use_scratch:
            scratch_shapes = [pltpu.VMEM((tile_b, d_out_p), jnp.float32)]
            kernel = mlp_kernel_chunked_scratch
        else:
            scratch_shapes = []
            kernel = mlp_kernel_chunked_inplace
        semantics = ("parallel", "arbitrary")
        # TODO(synk): on v5e with exposed weight DMA, pipeline_mode=pl.Buffered(3)
        #             on the W1/W2 specs can hide one more in-flight transfer.

    out_p = pl.pallas_call(
        kernel,
        out_shape=jax.ShapeDtypeStruct((B_p, d_out_p), out_dtype),
        grid_spec=pltpu.PrefetchScalarGridSpec(
            num_scalar_prefetch=0,
            grid=grid,
            in_specs=in_specs,
            out_specs=out_specs,
            scratch_shapes=scratch_shapes,
        ),
        compiler_params=pltpu.CompilerParams(
            dimension_semantics=semantics,
            vmem_limit_bytes=vmem_limit,
        ),
        cost_estimate=cost,
    )(x_p, w1_p, b1_p, w2_p, b2_p)

    return out_p[:B, :d_out]


def reference_mlp(x, w1, b1, w2, b2):
    h = jnp.maximum(x @ w1 + b1, 0.0)
    return h @ w2 + b2


if __name__ == "__main__":
    # ---- test 1: tiny SimpleMLP shapes (resident / single-block fast path) --
    d_input, d_hid, d_out = 32, 64, 16
    batch = 8

    key = jax.random.PRNGKey(0)
    kx, k1, kb1, k2, kb2 = jax.random.split(key, 5)

    x = jax.random.normal(kx, (batch, d_input), dtype=jnp.float32)
    bound1 = 1.0 / d_input ** 0.5
    bound2 = 1.0 / d_hid ** 0.5
    # nn.Linear-style uniform init, stored transposed: (in, out).
    w1 = jax.random.uniform(k1, (d_input, d_hid), jnp.float32, -bound1, bound1)
    b1 = jax.random.uniform(kb1, (d_hid,), jnp.float32, -bound1, bound1)
    w2 = jax.random.uniform(k2, (d_hid, d_out), jnp.float32, -bound2, bound2)
    b2 = jax.random.uniform(kb2, (d_out,), jnp.float32, -bound2, bound2)

    ref = reference_mlp(x, w1, b1, w2, b2)

    # Default path: bf16 matmul inputs, f32 accumulation, weights resident.
    out = jax.block_until_ready(simple_mlp(x, w1, b1, w2, b2))
    assert out.shape == (batch, d_out)
    assert jnp.allclose(out, ref, atol=5e-2, rtol=5e-2), "bf16 mismatch vs reference"

    # f32 matmul inputs: bitwise-close to the f32 reference.
    out_f32 = jax.block_until_ready(
        simple_mlp(x, w1, b1, w2, b2, compute_dtype=jnp.float32))
    assert jnp.allclose(out_f32, ref, atol=1e-5, rtol=1e-5), "f32 mismatch vs reference"

    # ---- test 2: forced chunked mode (hidden streaming, batch-tiled grid) ---
    d_in2, d_hid2, d_out2, batch2 = 48, 256, 24, 20
    k = jax.random.split(jax.random.PRNGKey(1), 5)
    x2 = jax.random.normal(k[0], (batch2, d_in2), dtype=jnp.float32)
    w1_2 = jax.random.uniform(k[1], (d_in2, d_hid2), jnp.float32, -0.1, 0.1)
    b1_2 = jax.random.uniform(k[2], (d_hid2,), jnp.float32, -0.1, 0.1)
    w2_2 = jax.random.uniform(k[3], (d_hid2, d_out2), jnp.float32, -0.1, 0.1)
    b2_2 = jax.random.uniform(k[4], (d_out2,), jnp.float32, -0.1, 0.1)
    ref2 = reference_mlp(x2, w1_2, b1_2, w2_2, b2_2)

    # f32 output -> accumulates in-place into the resident output block.
    out2 = jax.block_until_ready(
        simple_mlp(x2, w1_2, b1_2, w2_2, b2_2, compute_dtype=jnp.float32,
                   tile_b=16, tile_h=128, force_chunked=True))
    assert out2.shape == (batch2, d_out2)
    assert jnp.allclose(out2, ref2, atol=1e-5, rtol=1e-5), "chunked f32 mismatch"

    # bf16 output -> chunked path with the f32 VMEM scratch accumulator.
    out3 = jax.block_until_ready(
        simple_mlp(x2.astype(jnp.bfloat16), w1_2, b1_2, w2_2, b2_2,
                   tile_b=16, tile_h=128, force_chunked=True))
    assert out3.shape == (batch2, d_out2) and out3.dtype == jnp.bfloat16
    assert jnp.allclose(out3.astype(jnp.float32), ref2, atol=1e-1, rtol=1e-1), \
        "chunked bf16 mismatch"

    print("KERNEL_OK")
</pallas_src>

<mosaic_0001>
module attributes {stable_mosaic.version = 11 : i64} {
  func.func @mlp_kernel_resident(%arg0: i32, %arg1: memref<16x128xbf16, #tpu.memory_space<vmem>>, %arg2: memref<128x128xbf16, #tpu.memory_space<vmem>>, %arg3: memref<1x128xf32, #tpu.memory_space<vmem>>, %arg4: memref<128x128xbf16, #tpu.memory_space<vmem>>, %arg5: memref<1x128xf32, #tpu.memory_space<vmem>>, %arg6: memref<16x128xf32, #tpu.memory_space<vmem>>) attributes {dimension_semantics = [#tpu.dimension_semantics<parallel>], iteration_bounds = array<i64: 1>, scalar_prefetch = 0 : i64, scratch_operands = 0 : i64, tpu.core_type = #tpu.core_type<tc>, window_params = [{transform_indices = @transform_0, window_bounds = array<i64: 16, 128>}, {pipeline_mode = #tpu.pipeline_mode<synchronous>, transform_indices = @transform_1, window_bounds = array<i64: 128, 128>}, {pipeline_mode = #tpu.pipeline_mode<synchronous>, transform_indices = @transform_2, window_bounds = array<i64: 1, 128>}, {pipeline_mode = #tpu.pipeline_mode<synchronous>, transform_indices = @transform_3, window_bounds = array<i64: 128, 128>}, {pipeline_mode = #tpu.pipeline_mode<synchronous>, transform_indices = @transform_4, window_bounds = array<i64: 1, 128>}, {transform_indices = @transform_5, window_bounds = array<i64: 16, 128>}]} {
    %c0 = arith.constant 0 : index
    %c0_0 = arith.constant 0 : index
    %0 = vector.load %arg1[%c0, %c0_0] : memref<16x128xbf16, #tpu.memory_space<vmem>>, vector<16x128xbf16>
    %c0_1 = arith.constant 0 : index
    %c0_2 = arith.constant 0 : index
    %1 = vector.load %arg2[%c0_1, %c0_2] : memref<128x128xbf16, #tpu.memory_space<vmem>>, vector<128x128xbf16>
    %cst = arith.constant dense<0.000000e+00> : vector<16x128xf32>
    %2 = tpu.matmul %0, %1, %cst {dimension_numbers = #tpu.dot_dimension_numbers<[1], [0], [0], [1], [0, 0, 1, 1], [], []>} : vector<16x128xbf16>, vector<128x128xbf16>, vector<16x128xf32> -> vector<16x128xf32>
    %c0_3 = arith.constant 0 : index
    %c0_4 = arith.constant 0 : index
    %3 = vector.load %arg3[%c0_3, %c0_4] : memref<1x128xf32, #tpu.memory_space<vmem>>, vector<1x128xf32>
    %4 = vector.broadcast %3 : vector<1x128xf32> to vector<16x128xf32>
    %5 = arith.addf %2, %4 : vector<16x128xf32>
    %cst_5 = arith.constant 0.000000e+00 : f32
    %6 = vector.broadcast %cst_5 : f32 to vector<16x128xf32>
    %7 = arith.maximumf %5, %6 : vector<16x128xf32>
    %8 = arith.truncf %7 : vector<16x128xf32> to vector<16x128xbf16>
    %c0_6 = arith.constant 0 : index
    %c0_7 = arith.constant 0 : index
    %9 = vector.load %arg4[%c0_6, %c0_7] : memref<128x128xbf16, #tpu.memory_space<vmem>>, vector<128x128xbf16>
    %cst_8 = arith.constant dense<0.000000e+00> : vector<16x128xf32>
    %10 = tpu.matmul %8, %9, %cst_8 {dimension_numbers = #tpu.dot_dimension_numbers<[1], [0], [0], [1], [0, 0, 1, 1], [], []>} : vector<16x128xbf16>, vector<128x128xbf16>, vector<16x128xf32> -> vector<16x128xf32>
    %c0_9 = arith.constant 0 : index
    %c0_10 = arith.constant 0 : index
    %11 = vector.load %arg5[%c0_9, %c0_10] : memref<1x128xf32, #tpu.memory_space<vmem>>, vector<1x128xf32>
    %12 = vector.broadcast %11 : vector<1x128xf32> to vector<16x128xf32>
    %13 = arith.addf %10, %12 : vector<16x128xf32>
    %c0_11 = arith.constant 0 : index
    %c0_12 = arith.constant 0 : index
    %14 = vector.load %arg6[%c0_11, %c0_12] : memref<16x128xf32, #tpu.memory_space<vmem>>, vector<16x128xf32>
    tpu.vector_store %arg6[%c0_11, %c0_12], %13 {strides = array<i32>} : memref<16x128xf32, #tpu.memory_space<vmem>>, vector<16x128xf32>,
    return
  }
  func.func @transform_0(%arg0: i32) -> (i32, i32) {
    %c0_i32 = arith.constant 0 : i32
    %c0_i32_0 = arith.constant 0 : i32
    return %arg0, %c0_i32 : i32, i32
  }
  func.func @transform_1(%arg0: i32) -> (i32, i32) {
    %c0_i32 = arith.constant 0 : i32
    %c0_i32_0 = arith.constant 0 : i32
    %c0_i32_1 = arith.constant 0 : i32
    return %c0_i32, %c0_i32_0 : i32, i32
  }
  func.func @transform_2(%arg0: i32) -> (i32, i32) {
    %c0_i32 = arith.constant 0 : i32
    %c0_i32_0 = arith.constant 0 : i32
    %c0_i32_1 = arith.constant 0 : i32
    return %c0_i32, %c0_i32_0 : i32, i32
  }
  func.func @transform_3(%arg0: i32) -> (i32, i32) {
    %c0_i32 = arith.constant 0 : i32
    %c0_i32_0 = arith.constant 0 : i32
    %c0_i32_1 = arith.constant 0 : i32
    return %c0_i32, %c0_i32_0 : i32, i32
  }
  func.func @transform_4(%arg0: i32) -> (i32, i32) {
    %c0_i32 = arith.constant 0 : i32
    %c0_i32_0 = arith.constant 0 : i32
    %c0_i32_1 = arith.constant 0 : i32
    return %c0_i32, %c0_i32_0 : i32, i32
  }
  func.func @transform_5(%arg0: i32) -> (i32, i32) {
    %c0_i32 = arith.constant 0 : i32
    %c0_i32_0 = arith.constant 0 : i32
    return %arg0, %c0_i32 : i32, i32
  }
}

</mosaic_0001>

<llo_original>
// kernel: tpu_custom_call.1
$region0: #{tpu_custom_call.1}
  #allocation0 [shape = 'u32[]', space=smem, size = 0x4, offset = 0x4, fixed_abs, tag = 'smem constant byte address 0x4 - core index']
  #allocation1 [shape = 'u32[144,128]{1,0:T(1,128)}', space=vmem, size = 0x12000, scoped, tag = 'internal scratch']
  %s0 = inlined_call_operand.hbm [shape: bf16[16,128], index: 0, kind: input, shape index: {}]
  %s1 = inlined_call_operand.hbm [shape: bf16[128,128], index: 1, kind: input, shape index: {}]
  %s2 = inlined_call_operand.vmem [shape: f32[1,128], index: 2, kind: input, shape index: {}]
  %s3 = inlined_call_operand.hbm [shape: bf16[128,128], index: 3, kind: input, shape index: {}]
  %s4 = inlined_call_operand.vmem [shape: f32[1,128], index: 4, kind: input, shape index: {}]
  %s5 = inlined_call_operand.hbm [shape: f32[16,128], index: 5, kind: output, shape index: {}]
  %s6 = sld [smem:[#allocation0]]
  $region42: #{tpu_custom_call.1} parent=0
    _
  %s8 = ssub.s32 1, %s6
  %s9 = scalar_select 0, %s8, %s6
  $region1: #{tpu_custom_call.1} parent=0
    #allocation2 [shape = 'u8[4096]{0}', space=vmem, size = 0x1000, scoped, tag = 'input window, operand 0, single buffered']
    #allocation3 [shape = 's32[1]{0}', space=sflag, size = 0x4, scoped, tag = 'scoped memory for tpu_custom_call.1']
    #allocation4 [shape = 's32[1]{0}', space=sflag, size = 0x4, scoped, tag = 'scoped memory for tpu_custom_call.1']
    #allocation5 [shape = 'u8[32768]{0}', space=vmem, size = 0x8000, scoped, tag = 'input window, operand 1, single buffered']
    #allocation6 [shape = 's32[1]{0}', space=sflag, size = 0x4, scoped, tag = 'scoped memory for tpu_custom_call.1']
    #allocation7 [shape = 'u8[32768]{0}', space=vmem, size = 0x8000, scoped, tag = 'input window, operand 3, single buffered']
    #allocation8 [shape = 'u8[8192]{0}', space=vmem, size = 0x2000, scoped, tag = 'output window, operand 0, single buffered']
    %10 = vsyncpa [#allocation3], 0
    %11 = vsyncpa [#allocation6], 0
    %12 = vsyncpa [#allocation4], 0
    // Predicated region
    $region2: #{tpu_custom_call.1} parent=1 // pred_check
      _
    $region3: #{tpu_custom_call.1} parent=1 // pred_check_branch
      %14 = sbr.rel (0) target = $region5
    $region4: #{tpu_custom_call.1} parent=1 // pred_region
      %s16 = ssub.s32 128, 128
      %17 = vsyncadd [#allocation3], %s16
      %s18 = sshll.u32 [#allocation2], 4
      %s19 = int_to_ptr.vmem [resolvable:$true] %s18
      %24 = dma.hbm_to_vmem [thread:$0]  %s0, 128, %s19, [#allocation3], 64, 64, 4
    $region5: #{tpu_custom_call.1} parent=1 // pred_fallthru
      _
    // Predicated region
    $region6: #{tpu_custom_call.1} parent=1 // pred_check
      _
    $region7: #{tpu_custom_call.1} parent=1 // pred_check_branch
      %26 = sbr.rel (0) target = $region9
    $region8: #{tpu_custom_call.1} parent=1 // pred_region
      %s28 = ssub.s32 1024, 1024
      %29 = vsyncadd [#allocation6], %s28
      %s30 = sshll.u32 [#allocation5], 4
      %s31 = int_to_ptr.vmem [resolvable:$true] %s30
      %36 = dma.hbm_to_vmem [thread:$0]  %s1, 1024, %s31, [#allocation6], 64, 64, 4
    $region9: #{tpu_custom_call.1} parent=1 // pred_fallthru
      _
    // Predicated region
    $region10: #{tpu_custom_call.1} parent=1 // pred_check
      _
    $region11: #{tpu_custom_call.1} parent=1 // pred_check_branch
      %38 = sbr.rel (0) target = $region13
    $region12: #{tpu_custom_call.1} parent=1 // pred_region
      _
    $region13: #{tpu_custom_call.1} parent=1 // pred_fallthru
      _
    // Predicated region
    $region14: #{tpu_custom_call.1} parent=1 // pred_check
      _
    $region15: #{tpu_custom_call.1} parent=1 // pred_check_branch
      %40 = sbr.rel (0) target = $region17
    $region16: #{tpu_custom_call.1} parent=1 // pred_region
      %s42 = ssub.s32 1024, 1024
      %43 = vsyncadd [#allocation6], %s42
      %s44 = sshll.u32 [#allocation7], 4
      %s45 = int_to_ptr.vmem [resolvable:$true] %s44
      %50 = dma.hbm_to_vmem [thread:$0]  %s3, 1024, %s45, [#allocation6], 64, 64, 4
    $region17: #{tpu_custom_call.1} parent=1 // pred_fallthru
      _
    // Predicated region
    $region18: #{tpu_custom_call.1} parent=1 // pred_check
      _
    $region19: #{tpu_custom_call.1} parent=1 // pred_check_branch
      %52 = sbr.rel (0) target = $region21
    $region20: #{tpu_custom_call.1} parent=1 // pred_region
      _
    $region21: #{tpu_custom_call.1} parent=1 // pred_fallthru
      _
    // Predicated region
    $region22: #{tpu_custom_call.1} parent=1 // pred_check
      _
    $region23: #{tpu_custom_call.1} parent=1 // pred_check_branch
      %54 = sbr.rel (0) target = $region25
    $region24: #{tpu_custom_call.1} parent=1 // pred_region
      %55 = dma.done [#allocation3], 128
    $region25: #{tpu_custom_call.1} parent=1 // pred_fallthru
      _
    // Predicated region
    $region26: #{tpu_custom_call.1} parent=1 // pred_check
      _
    $region27: #{tpu_custom_call.1} parent=1 // pred_check_branch
      %57 = sbr.rel (0) target = $region29
    $region28: #{tpu_custom_call.1} parent=1 // pred_region
      %58 = dma.done [#allocation6], 1024
    $region29: #{tpu_custom_call.1} parent=1 // pred_fallthru
      _
    // Predicated region
    $region30: #{tpu_custom_call.1} parent=1 // pred_check
      _
    $region31: #{tpu_custom_call.1} parent=1 // pred_check_branch
      %60 = sbr.rel (0) target = $region33
    $region32: #{tpu_custom_call.1} parent=1 // pred_region
      %61 = dma.done [#allocation6], 1024
    $region33: #{tpu_custom_call.1} parent=1 // pred_fallthru
      _
    %v63 = vld [vmem:[#allocation2] sm:$0xf]
    %v64 = vld [vmem:[#allocation2 + $0x4] sm:$0xf]
    %v65 = vld [vmem:[#allocation5] sm:$0xf]
    %v66 = vld [vmem:[#allocation5 + $0x4] sm:$0xf]
    %v67 = vld [vmem:[#allocation5 + $0x8] sm:$0xf]
    %v68 = vld [vmem:[#allocation5 + $0xc] sm:$0xf]
    %v69 = vld [vmem:[#allocation5 + $0x10] sm:$0xf]
    %v70 = vld [vmem:[#allocation5 + $0x14] sm:$0xf]
    %v71 = vld [vmem:[#allocation5 + $0x18] sm:$0xf]
    %v72 = vld [vmem:[#allocation5 + $0x1c] sm:$0xf]
    %v73 = vld [vmem:[#allocation5 + $0x20] sm:$0xf]
    %v74 = vld [vmem:[#allocation5 + $0x24] sm:$0xf]
    %v75 = vld [vmem:[#allocation5 + $0x28] sm:$0xf]
    %v76 = vld [vmem:[#allocation5 + $0x2c] sm:$0xf]
    %v77 = vld [vmem:[#allocation5 + $0x30] sm:$0xf]
    %v78 = vld [vmem:[#allocation5 + $0x34] sm:$0xf]
    %v79 = vld [vmem:[#allocation5 + $0x38] sm:$0xf]
    %v80 = vld [vmem:[#allocation5 + $0x3c] sm:$0xf]
    %v81 = vld [vmem:[%s2] sm:$0x1]
    %v83 = vlaneseq
    %v84 = vshrl.u32 %v83, 7
    %v85 = vsub.s32 0, %v84
    %v86 = vrot.slane %v81, %v85
    %v90 = vunpack.c.l.b16 %v63
    %v91 = vunpack.c.l.b16 %v64
    %v92 = vpack.c.b16 %v91, %v90
    %v110 = vunpack.c.l.b16 %v65
    %v111 = vunpack.c.l.b16 %v66
    %v112 = vunpack.c.l.b16 %v67
    %v113 = vunpack.c.l.b16 %v68
    %v114 = vunpack.c.l.b16 %v69
    %v115 = vunpack.c.l.b16 %v70
    %v116 = vunpack.c.l.b16 %v71
    %v117 = vunpack.c.l.b16 %v72
    %v118 = vunpack.c.l.b16 %v73
    %v119 = vunpack.c.l.b16 %v74
    %v120 = vunpack.c.l.b16 %v75
    %v121 = vunpack.c.l.b16 %v76
    %v122 = vunpack.c.l.b16 %v77
    %v123 = vunpack.c.l.b16 %v78
    %v124 = vunpack.c.l.b16 %v79
    %v125 = vunpack.c.l.b16 %v80
    %v126 = vpack.c.b16 %v111, %v110
    %v127 = vpack.c.b16 %v113, %v112
    %v128 = vpack.c.b16 %v115, %v114
    %v129 = vpack.c.b16 %v117, %v116
    %v130 = vpack.c.b16 %v119, %v118
    %v131 = vpack.c.b16 %v121, %v120
    %v132 = vpack.c.b16 %v123, %v122
    %v133 = vpack.c.b16 %v125, %v124
    %142 = vmatprep.subr.bf16.mxu0 0
    %143 = vmatpush1.bf16.msra.mxu0 %v126
    %144 = vmatprep.subr.bf16.mxu0 0
    %145 = vmatpush1.bf16.msra.mxu0 %v127
    %146 = vmatprep.subr.bf16.mxu0 0
    %147 = vmatpush1.bf16.msra.mxu0 %v128
    %148 = vmatprep.subr.bf16.mxu0 0
    %149 = vmatpush1.bf16.msra.mxu0 %v129
    %150 = vmatprep.subr.bf16.mxu0 0
    %151 = vmatpush1.bf16.msra.mxu0 %v130
    %152 = vmatprep.subr.bf16.mxu0 0
    %153 = vmatpush1.bf16.msra.mxu0 %v131
    %154 = vmatprep.subr.bf16.mxu0 0
    %155 = vmatpush1.bf16.msra.mxu0 %v132
    %156 = vmatprep.subr.bf16.mxu0 0
    %157 = vmatpush1.bf16.msra.mxu0 %v133
    %158 = vmatprep.subr.bf16.mxu0 0
    %159 = vmatpush1.bf16.msra.mxu0 0
    %160 = vmatprep.subr.bf16.mxu0 0
    %161 = vmatpush1.bf16.msra.mxu0 0
    %162 = vmatprep.subr.bf16.mxu0 0
    %163 = vmatpush1.bf16.msra.mxu0 0
    %164 = vmatprep.subr.bf16.mxu0 0
    %165 = vmatpush1.bf16.msra.mxu0 0
    %166 = vmatprep.subr.bf16.mxu0 0
    %167 = vmatpush1.bf16.msra.mxu0 0
    %168 = vmatprep.subr.bf16.mxu0 0
    %169 = vmatpush1.bf16.msra.mxu0 0
    %170 = vmatprep.subr.bf16.mxu0 0
    %171 = vmatpush1.bf16.msra.mxu0 0
    %172 = vmatprep.subr.bf16.mxu0 0
    %173 = vmatpush1.bf16.msra.mxu0 0
    %174 = vmatprep.mubr.bf16.mxu0 0
    %175 = vmatmul.mubr.bf16.gmra.mrb[0].mxu0 %v92
    %v176 = vpop.f32.mrb[0].mxu0
    %v177 = vadd.f32 %v86, %v176
    %v178 = vpop.f32.mrb[0].mxu0
    %v179 = vpop.f32.mrb[0].mxu0
    %v180 = vadd.f32 %v86, %v179
    %v181 = vpop.f32.mrb[0].mxu0
    %182 = vdwg.mxu0
    %v183 = vmax.f32 %v177, 0.0
    %v184 = vmax.f32 %v180, 0.0
    %v185 = vpack.c.bf16 %v184, %v183
    %v186 = vld [vmem:[#allocation7] sm:$0xf]
    %v187 = vld [vmem:[#allocation7 + $0x4] sm:$0xf]
    %v188 = vld [vmem:[#allocation7 + $0x8] sm:$0xf]
    %v189 = vld [vmem:[#allocation7 + $0xc] sm:$0xf]
    %v190 = vld [vmem:[#allocation7 + $0x10] sm:$0xf]
    %v191 = vld [vmem:[#allocation7 + $0x14] sm:$0xf]
    %v192 = vld [vmem:[#allocation7 + $0x18] sm:$0xf]
    %v193 = vld [vmem:[#allocation7 + $0x1c] sm:$0xf]
    %v194 = vld [vmem:[#allocation7 + $0x20] sm:$0xf]
    %v195 = vld [vmem:[#allocation7 + $0x24] sm:$0xf]
    %v196 = vld [vmem:[#allocation7 + $0x28] sm:$0xf]
    %v197 = vld [vmem:[#allocation7 + $0x2c] sm:$0xf]
    %v198 = vld [vmem:[#allocation7 + $0x30] sm:$0xf]
    %v199 = vld [vmem:[#allocation7 + $0x34] sm:$0xf]
    %v200 = vld [vmem:[#allocation7 + $0x38] sm:$0xf]
    %v201 = vld [vmem:[#allocation7 + $0x3c] sm:$0xf]
    %v202 = vld [vmem:[%s4] sm:$0x1]
    %v204 = vlaneseq
    %v205 = vshrl.u32 %v204, 7
    %v206 = vsub.s32 0, %v205
    %v207 = vrot.slane %v202, %v206
    %v225 = vunpack.c.l.b16 %v186
    %v226 = vunpack.c.l.b16 %v187
    %v227 = vunpack.c.l.b16 %v188
    %v228 = vunpack.c.l.b16 %v189
    %v229 = vunpack.c.l.b16 %v190
    %v230 = vunpack.c.l.b16 %v191
    %v231 = vunpack.c.l.b16 %v192
    %v232 = vunpack.c.l.b16 %v193
    %v233 = vunpack.c.l.b16 %v194
    %v234 = vunpack.c.l.b16 %v195
    %v235 = vunpack.c.l.b16 %v196
    %v236 = vunpack.c.l.b16 %v197
    %v237 = vunpack.c.l.b16 %v198
    %v238 = vunpack.c.l.b16 %v199
    %v239 = vunpack.c.l.b16 %v200
    %v240 = vunpack.c.l.b16 %v201
    %v241 = vpack.c.b16 %v226, %v225
    %v242 = vpack.c.b16 %v228, %v227
    %v243 = vpack.c.b16 %v230, %v229
    %v244 = vpack.c.b16 %v232, %v231
    %v245 = vpack.c.b16 %v234, %v233
    %v246 = vpack.c.b16 %v236, %v235
    %v247 = vpack.c.b16 %v238, %v237
    %v248 = vpack.c.b16 %v240, %v239
    %257 = vmatprep.subr.bf16.mxu0 0
    %258 = vmatpush1.bf16.msra.mxu0 %v241
    %259 = vmatprep.subr.bf16.mxu0 0
    %260 = vmatpush1.bf16.msra.mxu0 %v242
    %261 = vmatprep.subr.bf16.mxu0 0
    %262 = vmatpush1.bf16.msra.mxu0 %v243
    %263 = vmatprep.subr.bf16.mxu0 0
    %264 = vmatpush1.bf16.msra.mxu0 %v244
    %265 = vmatprep.subr.bf16.mxu0 0
    %266 = vmatpush1.bf16.msra.mxu0 %v245
    %267 = vmatprep.subr.bf16.mxu0 0
    %268 = vmatpush1.bf16.msra.mxu0 %v246
    %269 = vmatprep.subr.bf16.mxu0 0
    %270 = vmatpush1.bf16.msra.mxu0 %v247
    %271 = vmatprep.subr.bf16.mxu0 0
    %272 = vmatpush1.bf16.msra.mxu0 %v248
    %273 = vmatprep.subr.bf16.mxu0 0
    %274 = vmatpush1.bf16.msra.mxu0 0
    %275 = vmatprep.subr.bf16.mxu0 0
    %276 = vmatpush1.bf16.msra.mxu0 0
    %277 = vmatprep.subr.bf16.mxu0 0
    %278 = vmatpush1.bf16.msra.mxu0 0
    %279 = vmatprep.subr.bf16.mxu0 0
    %280 = vmatpush1.bf16.msra.mxu0 0
    %281 = vmatprep.subr.bf16.mxu0 0
    %282 = vmatpush1.bf16.msra.mxu0 0
    %283 = vmatprep.subr.bf16.mxu0 0
    %284 = vmatpush1.bf16.msra.mxu0 0
    %285 = vmatprep.subr.bf16.mxu0 0
    %286 = vmatpush1.bf16.msra.mxu0 0
    %287 = vmatprep.subr.bf16.mxu0 0
    %288 = vmatpush1.bf16.msra.mxu0 0
    %289 = vmatprep.mubr.bf16.mxu0 0
    %290 = vmatmul.mubr.bf16.gmra.mrb[0].mxu0 %v185
    %v291 = vpop.f32.mrb[0].mxu0
    %v292 = vadd.f32 %v207, %v291
    %v293 = vpop.f32.mrb[0].mxu0
    %v294 = vpop.f32.mrb[0].mxu0
    %v295 = vadd.f32 %v207, %v294
    %v296 = vpop.f32.mrb[0].mxu0
    %297 = vdwg.mxu0
    %298 = vst [vmem:[#allocation8] sm:$0xff] %v292
    %299 = vst [vmem:[#allocation8 + $0x8] sm:$0xff] %v295
    // Predicated region
    $region34: #{tpu_custom_call.1} parent=1 // pred_check
      _
    $region35: #{tpu_custom_call.1} parent=1 // pred_check_branch
      %301 = sbr.rel (0) target = $region37
    $region36: #{tpu_custom_call.1} parent=1 // pred_region
      %s303 = ssub.s32 256, 256
      %304 = vsyncadd [#allocation4], %s303
      %s305 = sshll.u32 [#allocation8], 4
      %s306 = int_to_ptr.vmem [resolvable:$true] %s305
      %311 = dma.vmem_to_hbm [thread:$0]  %s306, 256, %s5, [#allocation4], 128, 128, 8
    $region37: #{tpu_custom_call.1} parent=1 // pred_fallthru
      _
    // Predicated region
    $region38: #{tpu_custom_call.1} parent=1 // pred_check
      _
    $region39: #{tpu_custom_call.1} parent=1 // pred_check_branch
      %313 = sbr.rel (0) target = $region41
    $region40: #{tpu_custom_call.1} parent=1 // pred_region
      %314 = dma.done [#allocation4], 256
    $region41: #{tpu_custom_call.1} parent=1 // pred_fallthru
      _
    %315 = vsyncpa [#allocation3], 1
    %316 = vsyncpa [#allocation6], 1
    %317 = vsyncpa [#allocation4], 1

</llo_original>
